<compile_context>
chip_gen: v6e
topology: v6e:2x2x1
jax: 0.10.0
libtpu: 0.0.40
codegen_flags: <defaults>
</compile_context>

<pallas_src>
import functools

import jax
import jax.numpy as jnp
from jax.experimental import pallas as pl
from jax.experimental.pallas import tpu as pltpu

DROPOUT_P = 0.3
_DROP_THR_24 = int(round(DROPOUT_P * (1 << 24)))   # integer dropout threshold
MATMUL_DTYPE = jnp.bfloat16                         # MXU operand dtype
_TB_MAX = 256                                       # batch rows per grid step


def _round_up(n, m):
    return ((n + m - 1) // m) * m


def _make_kernel(training):
    """Build the MLP kernel; `training` is a static Python flag."""

    def kernel(seed_ref,                       # scalar-prefetch (SMEM) [1] int32
               x_ref,                          # [TB, 2H] f32
               w1_ref, b1_ref,                 # [2H, H] bf16, [1, H] f32
               w2_ref, b2_ref,                 # [H, H//2] bf16, [1, H//2] f32
               w3_ref, b3_ref,                 # [H//2, H//4] bf16, [1, H//4] f32
               w4r_ref, b4_ref,                # [1, H//4] f32, [1, 1] f32
               o_ref):                         # [TB, 1] f32
        tb = x_ref.shape[0]

        if training:
            seed_u = seed_ref[0].astype(jnp.uint32)
            # global row offset of this batch tile -> distinct masks per tile
            row0 = (pl.program_id(0) * tb).astype(jnp.uint32)
            thr = jnp.uint32(_DROP_THR_24)

            def dropout(v, salt):
                # counter-based hash RNG (murmur3-style fmix) on the VPU;
                # integer threshold compare, no float convert / scale.
                rows = (jax.lax.broadcasted_iota(jnp.int32, v.shape, 0)
                        .astype(jnp.uint32) + row0)
                cols = (jax.lax.broadcasted_iota(jnp.int32, v.shape, 1)
                        .astype(jnp.uint32))
                salt_c = jnp.uint32((salt * 0x9E3779B9) & 0xFFFFFFFF)
                h = (seed_u ^ salt_c)
                h = h ^ (rows * jnp.uint32(0x85EBCA6B)) ^ (cols * jnp.uint32(0xC2B2AE35))
                h = h ^ (h >> jnp.uint32(16))
                h = h * jnp.uint32(0x7FEB352D)
                h = h ^ (h >> jnp.uint32(15))
                h = h * jnp.uint32(0x846CA68B)
                h = h ^ (h >> jnp.uint32(16))
                keep = (h & jnp.uint32(0x00FFFFFF)) >= thr
                # inverted-dropout scale 1/(1-p) is folded into the next
                # layer's weights on the host -> only the select remains.
                return jnp.where(keep, v, 0.0)
        else:
            def dropout(v, salt):
                return v

        # F.dropout(concat, 0.3)
        x = dropout(x_ref[...], 1)

        # fc1 + relu (+ dropout)
        h = jnp.dot(x.astype(w1_ref.dtype), w1_ref[...],
                    preferred_element_type=jnp.float32) + b1_ref[...]
        h = dropout(jnp.maximum(h, 0.0), 2)

        # fc2 + relu (+ dropout)
        h = jnp.dot(h.astype(w2_ref.dtype), w2_ref[...],
                    preferred_element_type=jnp.float32) + b2_ref[...]
        h = dropout(jnp.maximum(h, 0.0), 3)

        # fc3 + relu (+ dropout)
        h = jnp.dot(h.astype(w3_ref.dtype), w3_ref[...],
                    preferred_element_type=jnp.float32) + b3_ref[...]
        h = dropout(jnp.maximum(h, 0.0), 4)

        # fc4 (N=1): VPU multiply + XLU lane reduction, not a 1-col MXU matmul.
        # TODO(synk): lane-dense [1, TB] output layout would avoid the masked
        # (TB,1) stores, but output traffic is ~1/64 of the input here.
        out = jnp.sum(h * w4r_ref[...], axis=-1, keepdims=True) + b4_ref[...]
        o_ref[...] = out.astype(o_ref.dtype)

    return kernel


def _mlp_pallas(seed, x, w1, b1, w2, b2, w3, b3, w4r, b4, *, tb, training):
    bp, f = x.shape
    grid = (bp // tb,)

    def pinned(shape):
        nd = len(shape)
        return pl.BlockSpec(shape, lambda i, seed_ref: (0,) * nd)

    grid_spec = pltpu.PrefetchScalarGridSpec(
        num_scalar_prefetch=1,
        grid=grid,
        in_specs=[
            pl.BlockSpec((tb, f), lambda i, seed_ref: (i, 0)),   # x: batch-tiled
            pinned(w1.shape), pinned(b1.shape),
            pinned(w2.shape), pinned(b2.shape),
            pinned(w3.shape), pinned(b3.shape),
            pinned(w4r.shape), pinned(b4.shape),
        ],
        out_specs=pl.BlockSpec((tb, 1), lambda i, seed_ref: (i, 0)),
    )
    return pl.pallas_call(
        _make_kernel(training),
        out_shape=jax.ShapeDtypeStruct((bp, 1), jnp.float32),
        grid_spec=grid_spec,
        compiler_params=pltpu.CompilerParams(
            # batch tiles are independent -> parallel (uses both TCs on v7x).
            dimension_semantics=("parallel",)),
    )(seed, x, w1, b1, w2, b2, w3, b3, w4r, b4)


@functools.partial(jax.jit, static_argnames=("training",))
def mlp_forward(params, user, food, seed=0, training=True):
    # Embedding lookups (gather) + concat stay in XLA glue.
    # TODO(synk): fuse the gather into the kernel (scalar-prefetch indices +
    # manual DMA gather from HBM tables) to skip the x round-trip through HBM.
    u = jnp.take(params["user_embed"], user, axis=0)   # [B, H]
    f = jnp.take(params["food_embed"], food, axis=0)   # [B, H]
    x = jnp.concatenate([u, f], axis=-1)               # [B, 2H]

    b = x.shape[0]
    tb = min(_TB_MAX, _round_up(b, 8))
    bp = _round_up(b, tb)
    if bp != b:
        x = jnp.pad(x, ((0, bp - b), (0, 0)))

    # Weight prep outside the kernel (tiny, trace-time): fold the inverted
    # dropout scale into the consuming layer's weights; bf16 for MXU operands.
    scale = (1.0 / (1.0 - DROPOUT_P)) if training else 1.0
    w1 = (params["w1"] * scale).astype(MATMUL_DTYPE)
    w2 = (params["w2"] * scale).astype(MATMUL_DTYPE)
    w3 = (params["w3"] * scale).astype(MATMUL_DTYPE)
    w4r = (params["w4"] * scale).reshape(1, -1).astype(jnp.float32)  # [1, H//4]

    seed_arr = jnp.asarray(seed, dtype=jnp.int32).reshape(1)
    out = _mlp_pallas(seed_arr, x,
                      w1, params["b1"],
                      w2, params["b2"],
                      w3, params["b3"],
                      w4r, params["b4"],
                      tb=tb, training=training)
    # matches torch `x.squeeze()`
    return jnp.squeeze(out[:b])


def init_params(key, user_size, food_size, hidden):
    """Deterministic synthetic parameters matching the torch module shapes."""
    ks = jax.random.split(key, 10)
    # nn.Embedding: N(0, 1), with padding_idx=0 row zeroed
    user_embed = jax.random.normal(ks[0], (user_size, hidden), jnp.float32)
    user_embed = user_embed.at[0].set(0.0)
    food_embed = jax.random.normal(ks[1], (food_size, hidden), jnp.float32)
    food_embed = food_embed.at[0].set(0.0)

    def linear(kw, kb, fan_in, fan_out):
        bound = 1.0 / jnp.sqrt(fan_in)
        # stored already transposed: [in, out]
        w = jax.random.uniform(kw, (fan_in, fan_out), jnp.float32, -bound, bound)
        b = jax.random.uniform(kb, (1, fan_out), jnp.float32, -bound, bound)
        return w, b

    w1, b1 = linear(ks[2], ks[3], hidden * 2, hidden)
    w2, b2 = linear(ks[4], ks[5], hidden, hidden // 2)
    w3, b3 = linear(ks[6], ks[7], hidden // 2, hidden // 4)
    w4, b4 = linear(ks[8], ks[9], hidden // 4, 1)
    return dict(user_embed=user_embed, food_embed=food_embed,
                w1=w1, b1=b1, w2=w2, b2=b2, w3=w3, b3=b3, w4=w4, b4=b4)


if __name__ == "__main__":
    key = jax.random.PRNGKey(0)
    USER_SIZE, FOOD_SIZE, HIDDEN, BATCH = 16, 24, 32, 8

    pkey, ukey, fkey = jax.random.split(key, 3)
    params = init_params(pkey, USER_SIZE, FOOD_SIZE, HIDDEN)

    user = jax.random.randint(ukey, (BATCH,), 0, USER_SIZE, dtype=jnp.int32)
    food = jax.random.randint(fkey, (BATCH,), 0, FOOD_SIZE, dtype=jnp.int32)

    out = mlp_forward(params, user, food, seed=0, training=True)
    out = jax.block_until_ready(out)
    assert out.shape == (BATCH,)
    assert bool(jnp.all(jnp.isfinite(out)))

    # inference path (no dropout) also runs
    out_eval = jax.block_until_ready(
        mlp_forward(params, user, food, seed=0, training=False))
    assert out_eval.shape == (BATCH,)
    assert bool(jnp.all(jnp.isfinite(out_eval)))

    print("KERNEL_OK")
</pallas_src>

<mosaic_0001>
module attributes {stable_mosaic.version = 11 : i64} {
  func.func @kernel(%arg0: i32, %arg1: memref<1xi32, #tpu.memory_space<smem>>, %arg2: memref<8x64xf32, #tpu.memory_space<vmem>>, %arg3: memref<64x32xbf16, #tpu.memory_space<vmem>>, %arg4: memref<1x32xf32, #tpu.memory_space<vmem>>, %arg5: memref<32x16xbf16, #tpu.memory_space<vmem>>, %arg6: memref<1x16xf32, #tpu.memory_space<vmem>>, %arg7: memref<16x8xbf16, #tpu.memory_space<vmem>>, %arg8: memref<1x8xf32, #tpu.memory_space<vmem>>, %arg9: memref<1x8xf32, #tpu.memory_space<vmem>>, %arg10: memref<1x1xf32, #tpu.memory_space<vmem>>, %arg11: memref<8x1xf32, #tpu.memory_space<vmem>>) attributes {dimension_semantics = [#tpu.dimension_semantics<parallel>], iteration_bounds = array<i64: 1>, scalar_prefetch = 1 : i64, scratch_operands = 0 : i64, tpu.core_type = #tpu.core_type<tc>, window_params = [{transform_indices = @transform_0, window_bounds = array<i64: 8, 64>}, {pipeline_mode = #tpu.pipeline_mode<synchronous>, transform_indices = @transform_1, window_bounds = array<i64: 64, 32>}, {pipeline_mode = #tpu.pipeline_mode<synchronous>, transform_indices = @transform_2, window_bounds = array<i64: 1, 32>}, {pipeline_mode = #tpu.pipeline_mode<synchronous>, transform_indices = @transform_3, window_bounds = array<i64: 32, 16>}, {pipeline_mode = #tpu.pipeline_mode<synchronous>, transform_indices = @transform_4, window_bounds = array<i64: 1, 16>}, {pipeline_mode = #tpu.pipeline_mode<synchronous>, transform_indices = @transform_5, window_bounds = array<i64: 16, 8>}, {pipeline_mode = #tpu.pipeline_mode<synchronous>, transform_indices = @transform_6, window_bounds = array<i64: 1, 8>}, {pipeline_mode = #tpu.pipeline_mode<synchronous>, transform_indices = @transform_7, window_bounds = array<i64: 1, 8>}, {pipeline_mode = #tpu.pipeline_mode<synchronous>, transform_indices = @transform_8, window_bounds = array<i64: 1, 1>}, {transform_indices = @transform_9, window_bounds = array<i64: 8, 1>}]} {
    %c0 = arith.constant 0 : index
    %0 = memref.load %arg1[%c0] : memref<1xi32, #tpu.memory_space<smem>>
    %c8_i32 = arith.constant 8 : i32
    %1 = arith.muli %arg0, %c8_i32 : i32
    %c0_0 = arith.constant 0 : index
    %c0_1 = arith.constant 0 : index
    %2 = vector.load %arg2[%c0_0, %c0_1] : memref<8x64xf32, #tpu.memory_space<vmem>>, vector<8x64xf32>
    %3 = tpu.iota {dimensions = array<i32: 0>} : vector<8x64xi32>
    %4 = vector.broadcast %1 : i32 to vector<8x64xi32>
    %5 = arith.addi %3, %4 : vector<8x64xi32>
    %6 = tpu.iota {dimensions = array<i32: 1>} : vector<8x64xi32>
    %c-1640531527_i32 = arith.constant -1640531527 : i32
    %7 = arith.xori %0, %c-1640531527_i32 : i32
    %c-2048144789_i32 = arith.constant -2048144789 : i32
    %8 = vector.broadcast %c-2048144789_i32 : i32 to vector<8x64xi32>
    %9 = arith.muli %5, %8 : vector<8x64xi32>
    %10 = vector.broadcast %7 : i32 to vector<8x64xi32>
    %11 = arith.xori %10, %9 : vector<8x64xi32>
    %c-1028477387_i32 = arith.constant -1028477387 : i32
    %12 = vector.broadcast %c-1028477387_i32 : i32 to vector<8x64xi32>
    %13 = arith.muli %6, %12 : vector<8x64xi32>
    %14 = arith.xori %11, %13 : vector<8x64xi32>
    %c16_i32 = arith.constant 16 : i32
    %15 = vector.broadcast %c16_i32 : i32 to vector<8x64xi32>
    %16 = arith.shrui %14, %15 : vector<8x64xi32>
    %17 = arith.xori %14, %16 : vector<8x64xi32>
    %c2146121005_i32 = arith.constant 2146121005 : i32
    %18 = vector.broadcast %c2146121005_i32 : i32 to vector<8x64xi32>
    %19 = arith.muli %17, %18 : vector<8x64xi32>
    %c15_i32 = arith.constant 15 : i32
    %20 = vector.broadcast %c15_i32 : i32 to vector<8x64xi32>
    %21 = arith.shrui %19, %20 : vector<8x64xi32>
    %22 = arith.xori %19, %21 : vector<8x64xi32>
    %c-2073254261_i32 = arith.constant -2073254261 : i32
    %23 = vector.broadcast %c-2073254261_i32 : i32 to vector<8x64xi32>
    %24 = arith.muli %22, %23 : vector<8x64xi32>
    %c16_i32_2 = arith.constant 16 : i32
    %25 = vector.broadcast %c16_i32_2 : i32 to vector<8x64xi32>
    %26 = arith.shrui %24, %25 : vector<8x64xi32>
    %27 = arith.xori %24, %26 : vector<8x64xi32>
    %c16777215_i32 = arith.constant 16777215 : i32
    %28 = vector.broadcast %c16777215_i32 : i32 to vector<8x64xi32>
    %29 = arith.andi %27, %28 : vector<8x64xi32>
    %c5033165_i32 = arith.constant 5033165 : i32
    %30 = vector.broadcast %c5033165_i32 : i32 to vector<8x64xi32>
    %31 = arith.cmpi uge, %29, %30 : vector<8x64xi32>
    %cst = arith.constant 0.000000e+00 : f32
    %32 = vector.broadcast %cst : f32 to vector<8x64xf32>
    %33 = arith.select %31, %2, %32 : vector<8x64xi1>, vector<8x64xf32>
    %34 = arith.truncf %33 : vector<8x64xf32> to vector<8x64xbf16>
    %c0_3 = arith.constant 0 : index
    %c0_4 = arith.constant 0 : index
    %35 = vector.load %arg3[%c0_3, %c0_4] : memref<64x32xbf16, #tpu.memory_space<vmem>>, vector<64x32xbf16>
    %cst_5 = arith.constant dense<0.000000e+00> : vector<8x32xf32>
    %36 = tpu.matmul %34, %35, %cst_5 {dimension_numbers = #tpu.dot_dimension_numbers<[1], [0], [0], [1], [0, 0, 1, 1], [], []>} : vector<8x64xbf16>, vector<64x32xbf16>, vector<8x32xf32> -> vector<8x32xf32>
    %c0_6 = arith.constant 0 : index
    %c0_7 = arith.constant 0 : index
    %37 = vector.load %arg4[%c0_6, %c0_7] : memref<1x32xf32, #tpu.memory_space<vmem>>, vector<1x32xf32>
    %38 = vector.broadcast %37 : vector<1x32xf32> to vector<8x32xf32>
    %39 = arith.addf %36, %38 : vector<8x32xf32>
    %cst_8 = arith.constant 0.000000e+00 : f32
    %40 = vector.broadcast %cst_8 : f32 to vector<8x32xf32>
    %41 = arith.maximumf %39, %40 : vector<8x32xf32>
    %42 = tpu.iota {dimensions = array<i32: 0>} : vector<8x32xi32>
    %43 = vector.broadcast %1 : i32 to vector<8x32xi32>
    %44 = arith.addi %42, %43 : vector<8x32xi32>
    %45 = tpu.iota {dimensions = array<i32: 1>} : vector<8x32xi32>
    %c1013904242_i32 = arith.constant 1013904242 : i32
    %46 = arith.xori %0, %c1013904242_i32 : i32
    %c-2048144789_i32_9 = arith.constant -2048144789 : i32
    %47 = vector.broadcast %c-2048144789_i32_9 : i32 to vector<8x32xi32>
    %48 = arith.muli %44, %47 : vector<8x32xi32>
    %49 = vector.broadcast %46 : i32 to vector<8x32xi32>
    %50 = arith.xori %49, %48 : vector<8x32xi32>
    %c-1028477387_i32_10 = arith.constant -1028477387 : i32
    %51 = vector.broadcast %c-1028477387_i32_10 : i32 to vector<8x32xi32>
    %52 = arith.muli %45, %51 : vector<8x32xi32>
    %53 = arith.xori %50, %52 : vector<8x32xi32>
    %c16_i32_11 = arith.constant 16 : i32
    %54 = vector.broadcast %c16_i32_11 : i32 to vector<8x32xi32>
    %55 = arith.shrui %53, %54 : vector<8x32xi32>
    %56 = arith.xori %53, %55 : vector<8x32xi32>
    %c2146121005_i32_12 = arith.constant 2146121005 : i32
    %57 = vector.broadcast %c2146121005_i32_12 : i32 to vector<8x32xi32>
    %58 = arith.muli %56, %57 : vector<8x32xi32>
    %c15_i32_13 = arith.constant 15 : i32
    %59 = vector.broadcast %c15_i32_13 : i32 to vector<8x32xi32>
    %60 = arith.shrui %58, %59 : vector<8x32xi32>
    %61 = arith.xori %58, %60 : vector<8x32xi32>
    %c-2073254261_i32_14 = arith.constant -2073254261 : i32
    %62 = vector.broadcast %c-2073254261_i32_14 : i32 to vector<8x32xi32>
    %63 = arith.muli %61, %62 : vector<8x32xi32>
    %c16_i32_15 = arith.constant 16 : i32
    %64 = vector.broadcast %c16_i32_15 : i32 to vector<8x32xi32>
    %65 = arith.shrui %63, %64 : vector<8x32xi32>
    %66 = arith.xori %63, %65 : vector<8x32xi32>
    %c16777215_i32_16 = arith.constant 16777215 : i32
    %67 = vector.broadcast %c16777215_i32_16 : i32 to vector<8x32xi32>
    %68 = arith.andi %66, %67 : vector<8x32xi32>
    %c5033165_i32_17 = arith.constant 5033165 : i32
    %69 = vector.broadcast %c5033165_i32_17 : i32 to vector<8x32xi32>
    %70 = arith.cmpi uge, %68, %69 : vector<8x32xi32>
    %cst_18 = arith.constant 0.000000e+00 : f32
    %71 = vector.broadcast %cst_18 : f32 to vector<8x32xf32>
    %72 = arith.select %70, %41, %71 : vector<8x32xi1>, vector<8x32xf32>
    %73 = arith.truncf %72 : vector<8x32xf32> to vector<8x32xbf16>
    %c0_19 = arith.constant 0 : index
    %c0_20 = arith.constant 0 : index
    %74 = vector.load %arg5[%c0_19, %c0_20] : memref<32x16xbf16, #tpu.memory_space<vmem>>, vector<32x16xbf16>
    %cst_21 = arith.constant dense<0.000000e+00> : vector<8x16xf32>
    %75 = tpu.matmul %73, %74, %cst_21 {dimension_numbers = #tpu.dot_dimension_numbers<[1], [0], [0], [1], [0, 0, 1, 1], [], []>} : vector<8x32xbf16>, vector<32x16xbf16>, vector<8x16xf32> -> vector<8x16xf32>
    %c0_22 = arith.constant 0 : index
    %c0_23 = arith.constant 0 : index
    %76 = vector.load %arg6[%c0_22, %c0_23] : memref<1x16xf32, #tpu.memory_space<vmem>>, vector<1x16xf32>
    %77 = vector.broadcast %76 : vector<1x16xf32> to vector<8x16xf32>
    %78 = arith.addf %75, %77 : vector<8x16xf32>
    %cst_24 = arith.constant 0.000000e+00 : f32
    %79 = vector.broadcast %cst_24 : f32 to vector<8x16xf32>
    %80 = arith.maximumf %78, %79 : vector<8x16xf32>
    %81 = tpu.iota {dimensions = array<i32: 0>} : vector<8x16xi32>
    %82 = vector.broadcast %1 : i32 to vector<8x16xi32>
    %83 = arith.addi %81, %82 : vector<8x16xi32>
    %84 = tpu.iota {dimensions = array<i32: 1>} : vector<8x16xi32>
    %c-626627285_i32 = arith.constant -626627285 : i32
    %85 = arith.xori %0, %c-626627285_i32 : i32
    %c-2048144789_i32_25 = arith.constant -2048144789 : i32
    %86 = vector.broadcast %c-2048144789_i32_25 : i32 to vector<8x16xi32>
    %87 = arith.muli %83, %86 : vector<8x16xi32>
    %88 = vector.broadcast %85 : i32 to vector<8x16xi32>
    %89 = arith.xori %88, %87 : vector<8x16xi32>
    %c-1028477387_i32_26 = arith.constant -1028477387 : i32
    %90 = vector.broadcast %c-1028477387_i32_26 : i32 to vector<8x16xi32>
    %91 = arith.muli %84, %90 : vector<8x16xi32>
    %92 = arith.xori %89, %91 : vector<8x16xi32>
    %c16_i32_27 = arith.constant 16 : i32
    %93 = vector.broadcast %c16_i32_27 : i32 to vector<8x16xi32>
    %94 = arith.shrui %92, %93 : vector<8x16xi32>
    %95 = arith.xori %92, %94 : vector<8x16xi32>
    %c2146121005_i32_28 = arith.constant 2146121005 : i32
    %96 = vector.broadcast %c2146121005_i32_28 : i32 to vector<8x16xi32>
    %97 = arith.muli %95, %96 : vector<8x16xi32>
    %c15_i32_29 = arith.constant 15 : i32
    %98 = vector.broadcast %c15_i32_29 : i32 to vector<8x16xi32>
    %99 = arith.shrui %97, %98 : vector<8x16xi32>
    %100 = arith.xori %97, %99 : vector<8x16xi32>
    %c-2073254261_i32_30 = arith.constant -2073254261 : i32
    %101 = vector.broadcast %c-2073254261_i32_30 : i32 to vector<8x16xi32>
    %102 = arith.muli %100, %101 : vector<8x16xi32>
    %c16_i32_31 = arith.constant 16 : i32
    %103 = vector.broadcast %c16_i32_31 : i32 to vector<8x16xi32>
    %104 = arith.shrui %102, %103 : vector<8x16xi32>
    %105 = arith.xori %102, %104 : vector<8x16xi32>
    %c16777215_i32_32 = arith.constant 16777215 : i32
    %106 = vector.broadcast %c16777215_i32_32 : i32 to vector<8x16xi32>
    %107 = arith.andi %105, %106 : vector<8x16xi32>
    %c5033165_i32_33 = arith.constant 5033165 : i32
    %108 = vector.broadcast %c5033165_i32_33 : i32 to vector<8x16xi32>
    %109 = arith.cmpi uge, %107, %108 : vector<8x16xi32>
    %cst_34 = arith.constant 0.000000e+00 : f32
    %110 = vector.broadcast %cst_34 : f32 to vector<8x16xf32>
    %111 = arith.select %109, %80, %110 : vector<8x16xi1>, vector<8x16xf32>
    %112 = arith.truncf %111 : vector<8x16xf32> to vector<8x16xbf16>
    %c0_35 = arith.constant 0 : index
    %c0_36 = arith.constant 0 : index
    %113 = vector.load %arg7[%c0_35, %c0_36] : memref<16x8xbf16, #tpu.memory_space<vmem>>, vector<16x8xbf16>
    %cst_37 = arith.constant dense<0.000000e+00> : vector<8x8xf32>
    %114 = tpu.matmul %112, %113, %cst_37 {dimension_numbers = #tpu.dot_dimension_numbers<[1], [0], [0], [1], [0, 0, 1, 1], [], []>} : vector<8x16xbf16>, vector<16x8xbf16>, vector<8x8xf32> -> vector<8x8xf32>
    %c0_38 = arith.constant 0 : index
    %c0_39 = arith.constant 0 : index
    %115 = vector.load %arg8[%c0_38, %c0_39] : memref<1x8xf32, #tpu.memory_space<vmem>>, vector<1x8xf32>
    %116 = vector.broadcast %115 : vector<1x8xf32> to vector<8x8xf32>
    %117 = arith.addf %114, %116 : vector<8x8xf32>
    %cst_40 = arith.constant 0.000000e+00 : f32
    %118 = vector.broadcast %cst_40 : f32 to vector<8x8xf32>
    %119 = arith.maximumf %117, %118 : vector<8x8xf32>
    %120 = tpu.iota {dimensions = array<i32: 0>} : vector<8x8xi32>
    %121 = vector.broadcast %1 : i32 to vector<8x8xi32>
    %122 = arith.addi %120, %121 : vector<8x8xi32>
    %123 = tpu.iota {dimensions = array<i32: 1>} : vector<8x8xi32>
    %c2027808484_i32 = arith.constant 2027808484 : i32
    %124 = arith.xori %0, %c2027808484_i32 : i32
    %c-2048144789_i32_41 = arith.constant -2048144789 : i32
    %125 = vector.broadcast %c-2048144789_i32_41 : i32 to vector<8x8xi32>
    %126 = arith.muli %122, %125 : vector<8x8xi32>
    %127 = vector.broadcast %124 : i32 to vector<8x8xi32>
    %128 = arith.xori %127, %126 : vector<8x8xi32>
    %c-1028477387_i32_42 = arith.constant -1028477387 : i32
    %129 = vector.broadcast %c-1028477387_i32_42 : i32 to vector<8x8xi32>
    %130 = arith.muli %123, %129 : vector<8x8xi32>
    %131 = arith.xori %128, %130 : vector<8x8xi32>
    %c16_i32_43 = arith.constant 16 : i32
    %132 = vector.broadcast %c16_i32_43 : i32 to vector<8x8xi32>
    %133 = arith.shrui %131, %132 : vector<8x8xi32>
    %134 = arith.xori %131, %133 : vector<8x8xi32>
    %c2146121005_i32_44 = arith.constant 2146121005 : i32
    %135 = vector.broadcast %c2146121005_i32_44 : i32 to vector<8x8xi32>
    %136 = arith.muli %134, %135 : vector<8x8xi32>
    %c15_i32_45 = arith.constant 15 : i32
    %137 = vector.broadcast %c15_i32_45 : i32 to vector<8x8xi32>
    %138 = arith.shrui %136, %137 : vector<8x8xi32>
    %139 = arith.xori %136, %138 : vector<8x8xi32>
    %c-2073254261_i32_46 = arith.constant -2073254261 : i32
    %140 = vector.broadcast %c-2073254261_i32_46 : i32 to vector<8x8xi32>
    %141 = arith.muli %139, %140 : vector<8x8xi32>
    %c16_i32_47 = arith.constant 16 : i32
    %142 = vector.broadcast %c16_i32_47 : i32 to vector<8x8xi32>
    %143 = arith.shrui %141, %142 : vector<8x8xi32>
    %144 = arith.xori %141, %143 : vector<8x8xi32>
    %c16777215_i32_48 = arith.constant 16777215 : i32
    %145 = vector.broadcast %c16777215_i32_48 : i32 to vector<8x8xi32>
    %146 = arith.andi %144, %145 : vector<8x8xi32>
    %c5033165_i32_49 = arith.constant 5033165 : i32
    %147 = vector.broadcast %c5033165_i32_49 : i32 to vector<8x8xi32>
    %148 = arith.cmpi uge, %146, %147 : vector<8x8xi32>
    %cst_50 = arith.constant 0.000000e+00 : f32
    %149 = vector.broadcast %cst_50 : f32 to vector<8x8xf32>
    %150 = arith.select %148, %119, %149 : vector<8x8xi1>, vector<8x8xf32>
    %c0_51 = arith.constant 0 : index
    %c0_52 = arith.constant 0 : index
    %151 = vector.load %arg9[%c0_51, %c0_52] : memref<1x8xf32, #tpu.memory_space<vmem>>, vector<1x8xf32>
    %152 = vector.broadcast %151 : vector<1x8xf32> to vector<8x8xf32>
    %153 = arith.mulf %150, %152 : vector<8x8xf32>
    %cst_53 = arith.constant dense<0.000000e+00> : vector<8xf32>
    %154 = vector.multi_reduction <add>, %153, %cst_53 [1] : vector<8x8xf32> to vector<8xf32>
    %155 = vector.shape_cast %154 : vector<8xf32> to vector<8x1xf32>
    %c0_54 = arith.constant 0 : index
    %c0_55 = arith.constant 0 : index
    %156 = vector.load %arg10[%c0_54, %c0_55] : memref<1x1xf32, #tpu.memory_space<vmem>>, vector<1x1xf32>
    %157 = vector.broadcast %156 : vector<1x1xf32> to vector<8x1xf32>
    %158 = arith.addf %155, %157 : vector<8x1xf32>
    %c0_56 = arith.constant 0 : index
    %c0_57 = arith.constant 0 : index
    %159 = vector.load %arg11[%c0_56, %c0_57] : memref<8x1xf32, #tpu.memory_space<vmem>>, vector<8x1xf32>
    tpu.vector_store %arg11[%c0_56, %c0_57], %158 {strides = array<i32>} : memref<8x1xf32, #tpu.memory_space<vmem>>, vector<8x1xf32>,
    return
  }
  func.func @transform_0(%arg0: i32, %arg1: memref<1xi32, #tpu.memory_space<smem>>) -> (i32, i32) {
    %c0_i32 = arith.constant 0 : i32
    %c0_i32_0 = arith.constant 0 : i32
    return %arg0, %c0_i32 : i32, i32
  }
  func.func @transform_1(%arg0: i32, %arg1: memref<1xi32, #tpu.memory_space<smem>>) -> (i32, i32) {
    %c0_i32 = arith.constant 0 : i32
    %c0_i32_0 = arith.constant 0 : i32
    %c0_i32_1 = arith.constant 0 : i32
    return %c0_i32, %c0_i32_0 : i32, i32
  }
  func.func @transform_2(%arg0: i32, %arg1: memref<1xi32, #tpu.memory_space<smem>>) -> (i32, i32) {
    %c0_i32 = arith.constant 0 : i32
    %c0_i32_0 = arith.constant 0 : i32
    %c0_i32_1 = arith.constant 0 : i32
    return %c0_i32, %c0_i32_0 : i32, i32
  }
  func.func @transform_3(%arg0: i32, %arg1: memref<1xi32, #tpu.memory_space<smem>>) -> (i32, i32) {
    %c0_i32 = arith.constant 0 : i32
    %c0_i32_0 = arith.constant 0 : i32
    %c0_i32_1 = arith.constant 0 : i32
    return %c0_i32, %c0_i32_0 : i32, i32
  }
  func.func @transform_4(%arg0: i32, %arg1: memref<1xi32, #tpu.memory_space<smem>>) -> (i32, i32) {
    %c0_i32 = arith.constant 0 : i32
    %c0_i32_0 = arith.constant 0 : i32
    %c0_i32_1 = arith.constant 0 : i32
    return %c0_i32, %c0_i32_0 : i32, i32
  }
  func.func @transform_5(%arg0: i32, %arg1: memref<1xi32, #tpu.memory_space<smem>>) -> (i32, i32) {
    %c0_i32 = arith.constant 0 : i32
    %c0_i32_0 = arith.constant 0 : i32
    %c0_i32_1 = arith.constant 0 : i32
    return %c0_i32, %c0_i32_0 : i32, i32
  }
  func.func @transform_6(%arg0: i32, %arg1: memref<1xi32, #tpu.memory_space<smem>>) -> (i32, i32) {
    %c0_i32 = arith.constant 0 : i32
    %c0_i32_0 = arith.constant 0 : i32
    %c0_i32_1 = arith.constant 0 : i32
    return %c0_i32, %c0_i32_0 : i32, i32
  }
  func.func @transform_7(%arg0: i32, %arg1: memref<1xi32, #tpu.memory_space<smem>>) -> (i32, i32) {
    %c0_i32 = arith.constant 0 : i32
    %c0_i32_0 = arith.constant 0 : i32
    %c0_i32_1 = arith.constant 0 : i32
    return %c0_i32, %c0_i32_0 : i32, i32
  }
  func.func @transform_8(%arg0: i32, %arg1: memref<1xi32, #tpu.memory_space<smem>>) -> (i32, i32) {
    %c0_i32 = arith.constant 0 : i32
    %c0_i32_0 = arith.constant 0 : i32
    %c0_i32_1 = arith.constant 0 : i32
    return %c0_i32, %c0_i32_0 : i32, i32
  }
  func.func @transform_9(%arg0: i32, %arg1: memref<1xi32, #tpu.memory_space<smem>>) -> (i32, i32) {
    %c0_i32 = arith.constant 0 : i32
    %c0_i32_0 = arith.constant 0 : i32
    return %arg0, %c0_i32 : i32, i32
  }
}

</mosaic_0001>

<llo_original>
// kernel: mlp_forward.1
$region0: #{mlp_forward.1}
  #allocation0 [shape = 'u32[]', space=smem, size = 0x4, offset = 0x4, fixed_abs, tag = 'smem constant byte address 0x4 - core index']
  #allocation1 [shape = 'u32[144,128]{1,0:T(1,128)}', space=vmem, size = 0x12000, scoped, tag = 'internal scratch']
  #allocation2 [shape = 's32[1]{0}', space=sflag, size = 0x4, scoped, tag = 'scoped memory for mlp_forward.1']
  #allocation3 [shape = 's32[1]{0:T(128)S(6)}', space=smem, size = 0x200, scoped, tag = 'prefetched SMEM operand 0']
  #allocation4 [shape = 'f32[1,1]{1,0:T(1,128)S(1)}', space=vmem, size = 0x200, scoped, tag = 'scoped memory for mlp_forward.1']
  %s0 = inlined_call_operand.<no memory space> [shape: s32[1], index: 0, kind: input, shape index: {}]
  %s1 = inlined_call_operand.vmem [shape: f32[8,64], index: 1, kind: input, shape index: {}]
  %s2 = inlined_call_operand.vmem [shape: bf16[64,32], index: 2, kind: input, shape index: {}]
  %s3 = inlined_call_operand.vmem [shape: f32[1,32], index: 3, kind: input, shape index: {}]
  %s4 = inlined_call_operand.vmem [shape: bf16[32,16], index: 4, kind: input, shape index: {}]
  %s5 = inlined_call_operand.vmem [shape: f32[1,16], index: 5, kind: input, shape index: {}]
  %s6 = inlined_call_operand.vmem [shape: bf16[16,8], index: 6, kind: input, shape index: {}]
  %s7 = inlined_call_operand.vmem [shape: f32[1,8], index: 7, kind: input, shape index: {}]
  %s8 = inlined_call_operand.vmem [shape: f32[1,8], index: 8, kind: input, shape index: {}]
  %s9 = inlined_call_operand.<no memory space> [shape: f32[1,1], index: 9, kind: input, shape index: {}]
  %s10 = inlined_call_operand.vmem [shape: f32[8,1], index: 10, kind: output, shape index: {}]
  %s11 = sld [smem:[#allocation0]]
  $region46: #{mlp_forward.1} parent=0
    _
  %s13 = ssub.s32 1, %s11
  %s14 = scalar_select 0, %s13, %s11
  %15 = sst [smem:[#allocation3]] %s0
  %v16 = vstv %s9
  %17 = vst [vmem:[#allocation4] sm:$0x1] %v16
  // Predicated region
  $region2: #{mlp_forward.1} parent=0 // pred_check
    _
  $region3: #{mlp_forward.1} parent=0 // pred_check_branch
    %19 = sbr.rel (0) target = $region5
  $region4: #{mlp_forward.1} parent=0 // pred_region
    _
  $region5: #{mlp_forward.1} parent=0 // pred_fallthru
    _
  // Predicated region
  $region6: #{mlp_forward.1} parent=0 // pred_check
    _
  $region7: #{mlp_forward.1} parent=0 // pred_check_branch
    %21 = sbr.rel (0) target = $region9
  $region8: #{mlp_forward.1} parent=0 // pred_region
    _
  $region9: #{mlp_forward.1} parent=0 // pred_fallthru
    _
  // Predicated region
  $region10: #{mlp_forward.1} parent=0 // pred_check
    _
  $region11: #{mlp_forward.1} parent=0 // pred_check_branch
    %23 = sbr.rel (0) target = $region13
  $region12: #{mlp_forward.1} parent=0 // pred_region
    _
  $region13: #{mlp_forward.1} parent=0 // pred_fallthru
    _
  // Predicated region
  $region14: #{mlp_forward.1} parent=0 // pred_check
    _
  $region15: #{mlp_forward.1} parent=0 // pred_check_branch
    %25 = sbr.rel (0) target = $region17
  $region16: #{mlp_forward.1} parent=0 // pred_region
    _
  $region17: #{mlp_forward.1} parent=0 // pred_fallthru
    _
  // Predicated region
  $region18: #{mlp_forward.1} parent=0 // pred_check
    _
  $region19: #{mlp_forward.1} parent=0 // pred_check_branch
    %27 = sbr.rel (0) target = $region21
  $region20: #{mlp_forward.1} parent=0 // pred_region
    _
  $region21: #{mlp_forward.1} parent=0 // pred_fallthru
    _
  // Predicated region
  $region22: #{mlp_forward.1} parent=0 // pred_check
    _
  $region23: #{mlp_forward.1} parent=0 // pred_check_branch
    %29 = sbr.rel (0) target = $region25
  $region24: #{mlp_forward.1} parent=0 // pred_region
    _
  $region25: #{mlp_forward.1} parent=0 // pred_fallthru
    _
  // Predicated region
  $region26: #{mlp_forward.1} parent=0 // pred_check
    _
  $region27: #{mlp_forward.1} parent=0 // pred_check_branch
    %31 = sbr.rel (0) target = $region29
  $region28: #{mlp_forward.1} parent=0 // pred_region
    _
  $region29: #{mlp_forward.1} parent=0 // pred_fallthru
    _
  // Predicated region
  $region30: #{mlp_forward.1} parent=0 // pred_check
    _
  $region31: #{mlp_forward.1} parent=0 // pred_check_branch
    %33 = sbr.rel (0) target = $region33
  $region32: #{mlp_forward.1} parent=0 // pred_region
    _
  $region33: #{mlp_forward.1} parent=0 // pred_fallthru
    _
  // Predicated region
  $region34: #{mlp_forward.1} parent=0 // pred_check
    _
  $region35: #{mlp_forward.1} parent=0 // pred_check_branch
    %35 = sbr.rel (0) target = $region37
  $region36: #{mlp_forward.1} parent=0 // pred_region
    _
  $region37: #{mlp_forward.1} parent=0 // pred_fallthru
    _
  %s37 = sld [smem:[#allocation3]]
  %s38 = smul.u32 0, 8
  %v39 = vld [vmem:[%s1] sm:$0xff]
  %v40 = vlaneseq
  %v41 = vshrl.u32 %v40, 7
  %v42 = vstv %s38
  %v43 = vadd.s32 %v41, %v42
  %v44 = vlaneseq
  %v45 = vand.u32 %v44, 127
  %s46 = sxor.u32 %s37, 2654435769
  %v47 = vmul.u32 %v43, 2246822507
  %v48 = vstv %s46
  %v49 = vxor.u32 %v48, %v47
  %v50 = vmul.u32 %v45, 3266489909
  %v51 = vxor.u32 %v49, %v50
  %v52 = vshrl.u32 %v51, 16
  %v53 = vxor.u32 %v51, %v52
  %v54 = vmul.u32 %v53, 2146121005
  %v55 = vshrl.u32 %v54, 15
  %v56 = vxor.u32 %v54, %v55
  %v57 = vmul.u32 %v56, 2221713035
  %v58 = vshrl.u32 %v57, 16
  %v59 = vxor.u32 %v57, %v58
  %v60 = vand.u32 %v59, 16777215
  %vm61 = vcmp.ge.u32.totalorder %v60, 5033165
  %v62 = vsel %vm61, %v39, 0.0
  %v63 = vpack.c.bf16 %v62, %v62
  %v64 = vld [vmem:[%s2] sm:$0xf]
  %v65 = vld [vmem:[%s2 + $0x4] sm:$0xf]
  %v66 = vld [vmem:[%s2 + $0x8] sm:$0xf]
  %v67 = vld [vmem:[%s2 + $0xc] sm:$0xf]
  %v68 = vld [vmem:[%s2 + $0x10] sm:$0xf]
  %v69 = vld [vmem:[%s2 + $0x14] sm:$0xf]
  %v70 = vld [vmem:[%s2 + $0x18] sm:$0xf]
  %v71 = vld [vmem:[%s2 + $0x1c] sm:$0xf]
  %v72 = vld [vmem:[%s3] sm:$0x1]
  %v74 = vlaneseq
  %v75 = vshrl.u32 %v74, 7
  %v76 = vsub.s32 0, %v75
  %v77 = vrot.slane %v72, %v76
  %v87 = vunpack.c.l.b16 %v64
  %v88 = vunpack.c.l.b16 %v65
  %v89 = vunpack.c.l.b16 %v66
  %v90 = vunpack.c.l.b16 %v67
  %v91 = vunpack.c.l.b16 %v68
  %v92 = vunpack.c.l.b16 %v69
  %v93 = vunpack.c.l.b16 %v70
  %v94 = vunpack.c.l.b16 %v71
  %v95 = vpack.c.b16 %v88, %v87
  %v96 = vpack.c.b16 %v90, %v89
  %v97 = vpack.c.b16 %v92, %v91
  %v98 = vpack.c.b16 %v94, %v93
  %vm103 = vcmask 523264
  %v105 = vsel %vm103, %v63, 0
  %107 = vmatprep.subr.bf16.mxu0 0
  %108 = vmatpush1.bf16.msra.mxu0 0
  %109 = vmatprep.subr.bf16.mxu0 0
  %110 = vmatpush1.bf16.msra.mxu0 0
  %111 = vmatprep.subr.bf16.mxu0 0
  %112 = vmatpush1.bf16.msra.mxu0 0
  %113 = vmatprep.subr.bf16.mxu0 0
  %114 = vmatpush1.bf16.msra.mxu0 0
  %115 = vmatprep.subr.bf16.mxu0 0
  %116 = vmatpush1.bf16.msra.mxu0 %v98
  %117 = vmatprep.subr.bf16.mxu0 0
  %118 = vmatpush1.bf16.msra.mxu0 %v97
  %119 = vmatprep.subr.bf16.mxu0 0
  %120 = vmatpush1.bf16.msra.mxu0 %v96
  %121 = vmatprep.subr.bf16.mxu0 0
  %122 = vmatpush1.bf16.msra.mxu0 %v95
  %123 = vmatprep.subr.bf16.mxu0 0
  %124 = vmatpush2.bf16.msra.mxu0 0
  %125 = vmatprep.subr.bf16.mxu0 0
  %126 = vmatpush2.bf16.msra.mxu0 0
  %127 = vmatprep.subr.bf16.mxu0 0
  %128 = vmatpush2.bf16.msra.mxu0 0
  %129 = vmatprep.subr.bf16.mxu0 0
  %130 = vmatpush2.bf16.msra.mxu0 0
  %131 = vmatprep.subr.bf16.mxu0 0
  %132 = vmatpush2.bf16.msra.mxu0 0
  %133 = vmatprep.subr.bf16.mxu0 0
  %134 = vmatpush2.bf16.msra.mxu0 0
  %135 = vmatprep.subr.bf16.mxu0 0
  %136 = vmatpush2.bf16.msra.mxu0 0
  %137 = vmatprep.subr.bf16.mxu0 0
  %138 = vmatpush2.bf16.msra.mxu0 0
  %139 = vmatprep.mubr.bf16.mxu0 0
  %140 = vmatmul.mubr.bf16.gmra.mxu0 %v105
  %v141 = vpop.f32.mrf.mxu0
  %v142 = vadd.f32 %v77, %v141
  %v143 = vpop.f32.mrf.mxu0
  %v144 = vpop.f32.mrf.mxu0
  %v145 = vpop.f32.mrf.mxu0
  %146 = vdwg.mxu0
  %v147 = vmax.f32 %v142, 0.0
  %s148 = sxor.u32 %s37, 1013904242
  %v149 = vstv %s148
  %v150 = vxor.u32 %v149, %v47
  %v151 = vxor.u32 %v150, %v50
  %v152 = vshrl.u32 %v151, 16
  %v153 = vxor.u32 %v151, %v152
  %v154 = vmul.u32 %v153, 2146121005
  %v155 = vshrl.u32 %v154, 15
  %v156 = vxor.u32 %v154, %v155
  %v157 = vmul.u32 %v156, 2221713035
  %v158 = vshrl.u32 %v157, 16
  %v159 = vxor.u32 %v157, %v158
  %v160 = vand.u32 %v159, 16777215
  %vm161 = vcmp.ge.u32.totalorder %v160, 5033165
  %v162 = vsel %vm161, %v147, 0.0
  %v163 = vpack.c.bf16 %v162, %v162
  %v164 = vld [vmem:[%s4] sm:$0xf]
  %v165 = vld [vmem:[%s4 + $0x4] sm:$0xf]
  %v166 = vld [vmem:[%s4 + $0x8] sm:$0xf]
  %v167 = vld [vmem:[%s4 + $0xc] sm:$0xf]
  %v168 = vld [vmem:[%s5] sm:$0x1]
  %v170 = vlaneseq
  %v171 = vshrl.u32 %v170, 7
  %v172 = vsub.s32 0, %v171
  %v173 = vrot.slane %v168, %v172
  %v179 = vunpack.c.l.b16 %v164
  %v180 = vunpack.c.l.b16 %v165
  %v181 = vunpack.c.l.b16 %v166
  %v182 = vunpack.c.l.b16 %v167
  %v183 = vpack.c.b16 %v180, %v179
  %v184 = vpack.c.b16 %v182, %v181
  %vm187 = vcmask 261120
  %v189 = vsel %vm187, %v163, 0
  %191 = vmatprep.subr.bf16.mxu0 0
  %192 = vmatpush1.bf16.msra.mxu0 0
  %193 = vmatprep.subr.bf16.mxu0 0
  %194 = vmatpush1.bf16.msra.mxu0 0
  %195 = vmatprep.subr.bf16.mxu0 0
  %196 = vmatpush1.bf16.msra.mxu0 0
  %197 = vmatprep.subr.bf16.mxu0 0
  %198 = vmatpush1.bf16.msra.mxu0 0
  %199 = vmatprep.subr.bf16.mxu0 0
  %200 = vmatpush1.bf16.msra.mxu0 0
  %201 = vmatprep.subr.bf16.mxu0 0
  %202 = vmatpush1.bf16.msra.mxu0 0
  %203 = vmatprep.subr.bf16.mxu0 0
  %204 = vmatpush1.bf16.msra.mxu0 %v184
  %205 = vmatprep.subr.bf16.mxu0 0
  %206 = vmatpush1.bf16.msra.mxu0 %v183
  %207 = vmatprep.subr.bf16.mxu0 0
  %208 = vmatpush2.bf16.msra.mxu0 0
  %209 = vmatprep.subr.bf16.mxu0 0
  %210 = vmatpush2.bf16.msra.mxu0 0
  %211 = vmatprep.subr.bf16.mxu0 0
  %212 = vmatpush2.bf16.msra.mxu0 0
  %213 = vmatprep.subr.bf16.mxu0 0
  %214 = vmatpush2.bf16.msra.mxu0 0
  %215 = vmatprep.subr.bf16.mxu0 0
  %216 = vmatpush2.bf16.msra.mxu0 0
  %217 = vmatprep.subr.bf16.mxu0 0
  %218 = vmatpush2.bf16.msra.mxu0 0
  %219 = vmatprep.subr.bf16.mxu0 0
  %220 = vmatpush2.bf16.msra.mxu0 0
  %221 = vmatprep.subr.bf16.mxu0 0
  %222 = vmatpush2.bf16.msra.mxu0 0
  %223 = vmatprep.mubr.bf16.mxu0 0
  %224 = vmatmul.mubr.bf16.gmra.mxu0 %v189
  %v225 = vpop.f32.mrf.mxu0
  %v226 = vadd.f32 %v173, %v225
  %v227 = vpop.f32.mrf.mxu0
  %v228 = vpop.f32.mrf.mxu0
  %v229 = vpop.f32.mrf.mxu0
  %230 = vdwg.mxu0
  %v231 = vmax.f32 %v226, 0.0
  %s232 = sxor.u32 %s37, 3668340011
  %v233 = vstv %s232
  %v234 = vxor.u32 %v233, %v47
  %v235 = vxor.u32 %v234, %v50
  %v236 = vshrl.u32 %v235, 16
  %v237 = vxor.u32 %v235, %v236
  %v238 = vmul.u32 %v237, 2146121005
  %v239 = vshrl.u32 %v238, 15
  %v240 = vxor.u32 %v238, %v239
  %v241 = vmul.u32 %v240, 2221713035
  %v242 = vshrl.u32 %v241, 16
  %v243 = vxor.u32 %v241, %v242
  %v244 = vand.u32 %v243, 16777215
  %vm245 = vcmp.ge.u32.totalorder %v244, 5033165
  %v246 = vsel %vm245, %v231, 0.0
  %v247 = vpack.c.bf16 %v246, %v246
  %v248 = vld [vmem:[%s6] sm:$0xf]
  %v249 = vld [vmem:[%s6 + $0x4] sm:$0xf]
  %v250 = vld [vmem:[%s7] sm:$0x1]
  %v252 = vlaneseq
  %v253 = vshrl.u32 %v252, 7
  %v254 = vsub.s32 0, %v253
  %v255 = vrot.slane %v250, %v254
  %v259 = vunpack.c.l.b16 %v248
  %v260 = vunpack.c.l.b16 %v249
  %v261 = vpack.c.b16 %v260, %v259
  %vm263 = vcmask 130048
  %v265 = vsel %vm263, %v247, 0
  %267 = vmatprep.subr.bf16.mxu0 0
  %268 = vmatpush1.bf16.msra.mxu0 0
  %269 = vmatprep.subr.bf16.mxu0 0
  %270 = vmatpush1.bf16.msra.mxu0 0
  %271 = vmatprep.subr.bf16.mxu0 0
  %272 = vmatpush1.bf16.msra.mxu0 0
  %273 = vmatprep.subr.bf16.mxu0 0
  %274 = vmatpush1.bf16.msra.mxu0 0
  %275 = vmatprep.subr.bf16.mxu0 0
  %276 = vmatpush1.bf16.msra.mxu0 0
  %277 = vmatprep.subr.bf16.mxu0 0
  %278 = vmatpush1.bf16.msra.mxu0 0
  %279 = vmatprep.subr.bf16.mxu0 0
  %280 = vmatpush1.bf16.msra.mxu0 0
  %281 = vmatprep.subr.bf16.mxu0 0
  %282 = vmatpush1.bf16.msra.mxu0 %v261
  %283 = vmatprep.subr.bf16.mxu0 0
  %284 = vmatpush2.bf16.msra.mxu0 0
  %285 = vmatprep.subr.bf16.mxu0 0
  %286 = vmatpush2.bf16.msra.mxu0 0
  %287 = vmatprep.subr.bf16.mxu0 0
  %288 = vmatpush2.bf16.msra.mxu0 0
  %289 = vmatprep.subr.bf16.mxu0 0
  %290 = vmatpush2.bf16.msra.mxu0 0
  %291 = vmatprep.subr.bf16.mxu0 0
  %292 = vmatpush2.bf16.msra.mxu0 0
  %293 = vmatprep.subr.bf16.mxu0 0
  %294 = vmatpush2.bf16.msra.mxu0 0
  %295 = vmatprep.subr.bf16.mxu0 0
  %296 = vmatpush2.bf16.msra.mxu0 0
  %297 = vmatprep.subr.bf16.mxu0 0
  %298 = vmatpush2.bf16.msra.mxu0 0
  %299 = vmatprep.mubr.bf16.mxu0 0
  %300 = vmatmul.mubr.bf16.gmra.mxu0 %v265
  %v301 = vpop.f32.mrf.mxu0
  %v302 = vadd.f32 %v255, %v301
  %v303 = vpop.f32.mrf.mxu0
  %v304 = vpop.f32.mrf.mxu0
  %v305 = vpop.f32.mrf.mxu0
  %306 = vdwg.mxu0
  %v307 = vmax.f32 %v302, 0.0
  %s308 = sxor.u32 %s37, 2027808484
  %v309 = vstv %s308
  %v310 = vxor.u32 %v309, %v47
  %v311 = vxor.u32 %v310, %v50
  %v312 = vshrl.u32 %v311, 16
  %v313 = vxor.u32 %v311, %v312
  %v314 = vmul.u32 %v313, 2146121005
  %v315 = vshrl.u32 %v314, 15
  %v316 = vxor.u32 %v314, %v315
  %v317 = vmul.u32 %v316, 2221713035
  %v318 = vshrl.u32 %v317, 16
  %v319 = vxor.u32 %v317, %v318
  %v320 = vand.u32 %v319, 16777215
  %vm321 = vcmp.ge.u32.totalorder %v320, 5033165
  %v322 = vsel %vm321, %v307, 0.0
  %v323 = vld [vmem:[%s8] sm:$0x1]
  %v325 = vlaneseq
  %v326 = vshrl.u32 %v325, 7
  %v327 = vsub.s32 0, %v326
  %v328 = vrot.slane %v323, %v327
  %v330 = vmul.f32 %v322, %v328
  %vm331 = vcmask 64512
  %v332 = vsel %vm331, %v330, 0.0
  %333 = vadd.xlane.f32.xlu0 %v332
  %v334 = vpop.xlane.xlu0 %333
  %v335 = vld [vmem:[#allocation4] sm:$0x1]
  %v337 = vlaneseq
  %v338 = vshrl.u32 %v337, 7
  %v339 = vsub.s32 0, %v338
  %v340 = vrot.slane %v335, %v339
  %v342 = vadd.f32 %v334, %v340
  %vm343 = vcmask 7168
  %344 = vst.msk [vmem:[%s10] sm:$0xff] %vm343, %v342
  // Predicated region
  $region38: #{mlp_forward.1} parent=0 // pred_check
    _
  $region39: #{mlp_forward.1} parent=0 // pred_check_branch
    %346 = sbr.rel (0) target = $region41
  $region40: #{mlp_forward.1} parent=0 // pred_region
    _
  $region41: #{mlp_forward.1} parent=0 // pred_fallthru
    _
  // Predicated region
  $region42: #{mlp_forward.1} parent=0 // pred_check
    _
  $region43: #{mlp_forward.1} parent=0 // pred_check_branch
    %348 = sbr.rel (0) target = $region45
  $region44: #{mlp_forward.1} parent=0 // pred_region
    _
  $region45: #{mlp_forward.1} parent=0 // pred_fallthru
    _

</llo_original>
